<compile_context>
chip_gen: v7x
topology: tpu7x:2x2x1
jax: 0.10.0
libtpu: 0.0.40
codegen_flags: <defaults>
</compile_context>

<pallas_src>
import functools
import math

import jax
import jax.numpy as jnp
from jax.experimental import pallas as pl
from jax.experimental.pallas import tpu as pltpu


_INV_SQRT2 = 1.0 / math.sqrt(2.0)


# -----------------------------------------------------------------------------
# Pallas kernels: elementwise half-Gaussian gate
#   weight = 0.5 - 0.5 * erf(|x - mu| * scale),   out = weight * x
# with per-(batch, channel) scalars mu and scale = 1 / ((std + eps) * sqrt(2)).
# TODO(synk): on v7x, if bundle dumps show the erf polynomial saturating the
# VALU, switch to an exp-based erfc evaluated on the EUP slot (needs tolerance
# sign-off); on v5e/v6e the kernel is HBM-bound and erf is hidden.
# -----------------------------------------------------------------------------

def _gate_kernel_bcast(ms_ref, x_ref, o_ref):
    """One (b, c) row per lane-row.

    ms_ref : (rt, 2)   column 0 = mu, column 1 = scale (per row)
    x_ref  : (rt, st)  rows = (b, c) pairs, lanes = spatial positions
    """
    x = x_ref[...].astype(jnp.float32)
    mu = ms_ref[:, 0:1]
    scale = ms_ref[:, 1:2]
    a = jnp.abs(x - mu) * scale                 # |norm| / sqrt(2)
    w = 0.5 - 0.5 * jax.lax.erf(a)              # == min(p, 1 - p)
    o_ref[...] = (w * x).astype(o_ref.dtype)


def _gate_kernel_packed(ms_ref, e_ref, x_ref, o_ref, *, k):
    """k (b, c) rows packed into each lane-row (lane-dense small-S path).

    ms_ref : (rt, 2k)  columns [0,k) = mu, [k,2k) = scale for the k packed rows
    e_ref  : (k, st)   0/1 selector: e[i, l] = 1 iff lane l belongs to packed row i
    x_ref  : (rt, st)
    The per-lane mu/scale expansion is a tiny MXU matmul (MXU is idle in this
    elementwise kernel), keeping the VPU free for the erf polynomial.
    """
    x = x_ref[...].astype(jnp.float32)
    ms = ms_ref[...]
    e = e_ref[...]
    mu = jnp.dot(ms[:, :k], e, preferred_element_type=jnp.float32)
    scale = jnp.dot(ms[:, k:], e, preferred_element_type=jnp.float32)
    a = jnp.abs(x - mu) * scale
    w = 0.5 - 0.5 * jax.lax.erf(a)
    o_ref[...] = (w * x).astype(o_ref.dtype)


# -----------------------------------------------------------------------------
# Tiling helpers
# -----------------------------------------------------------------------------

def _tpu_vmem_budget():
    """(per-buffer tile cap [bytes], vmem_limit_bytes), tuned per TPU generation.

    v5e/v6e have 128 MiB VMEM per core -> big tiles amortize the ~0.35 us
    per-grid-step overhead; v7x has only 64 MiB per TensorCore, so keep the
    double-buffered footprint (~4x the tile for x + out) well below it.
    """
    try:
        cap = int(pltpu.get_tpu_info().vmem_capacity_bytes)
    except Exception:
        cap = 64 * 1024 * 1024                      # conservative default
    if cap >= 100 * 1024 * 1024:                    # v5e / v6e (128 MiB)
        return 6 * 1024 * 1024, 64 * 1024 * 1024
    return 3 * 1024 * 1024, 40 * 1024 * 1024        # v7x-class (64 MiB / TC)


def _lane_tile(width, cap_elems):
    """Lane (last-dim) tile: full width if it fits (fully contiguous HBM DMA),
    else the largest multiple of 128 <= cap, preferring a divisor of `width`."""
    if width <= cap_elems:
        return width
    best = max(128, cap_elems - cap_elems % 128)
    t = best
    while t >= max(128, best // 2):
        if width % t == 0:
            return t
        t -= 128
    return best


def _row_tile(n_rows, lane_tile, per_buf_bytes):
    """Row (sublane) tile: as many rows as fit under the per-buffer byte cap."""
    max_rows = max(8, per_buf_bytes // (lane_tile * 4))
    if n_rows <= max_rows:
        return n_rows
    best = max(8, max_rows - max_rows % 8)
    t = best
    while t >= max(8, best // 2):
        if n_rows % t == 0:
            return t
        t -= 8
    return best


# -----------------------------------------------------------------------------
# Gate stage (Pallas)
# -----------------------------------------------------------------------------

def _hgelu_gate_4d(x_nchw, mu, scale):
    """Apply the per-(b, c) half-Gaussian gate to x with the Pallas kernel."""
    B, C, H, W = x_nchw.shape
    S = H * W
    R = B * C

    # Packing factor k: pack k whole (b, c) rows per lane-row so the packed row
    # width k*S is a multiple of 128 (lane-dense stores / full vregs even for
    # small spatial extents such as 8x8).  Falls back to k=1 when whole rows
    # cannot be packed evenly (correct, just masked).
    k = 128 // math.gcd(S, 128)
    if k > 1 and R % k != 0:
        k = 1
    Rp, L = R // k, k * S

    # NCHW -> (Rp, L): pure reshape of a contiguous array, no data movement.
    x_rows = x_nchw.reshape(Rp, L)

    # mu / scale combined into ONE small operand (halves small-DMA descriptors).
    ms = jnp.concatenate(
        [mu.reshape(Rp, k), scale.reshape(Rp, k)], axis=1).astype(jnp.float32)

    # Generation-aware tile sizes; cdiv grid (edge blocks masked by Pallas).
    per_buf_bytes, vmem_limit = _tpu_vmem_budget()
    lane_cap = max(512, per_buf_bytes // (4 * min(max(Rp, 8), 512)))
    st = _lane_tile(L, lane_cap)
    rt = _row_tile(Rp, st, per_buf_bytes)

    # v7x megacore: if the grid collapsed to a single block on a non-trivial
    # input, split the rows so both TensorCores get a "parallel" block.
    if (pl.cdiv(Rp, rt) * pl.cdiv(L, st) == 1
            and Rp >= 16 and Rp * L * 4 > (2 << 20)):
        rt = max(8, (((Rp + 1) // 2) + 7) // 8 * 8)

    grid = (pl.cdiv(Rp, rt), pl.cdiv(L, st))

    x_spec = pl.BlockSpec((rt, st), lambda i, j: (i, j))
    ms_spec = pl.BlockSpec((rt, 2 * k), lambda i, j: (i, 0))
    out_spec = pl.BlockSpec((rt, st), lambda i, j: (i, j))

    if k > 1:
        # 0/1 selector mapping each lane to its packed row: e[i, l] = (l // S == i).
        e_mat = jnp.repeat(jnp.eye(k, dtype=jnp.float32), S, axis=1)   # (k, L)
        kernel = functools.partial(_gate_kernel_packed, k=k)
        in_specs = [ms_spec, pl.BlockSpec((k, st), lambda i, j: (0, j)), x_spec]
        operands = (ms, e_mat, x_rows)
    else:
        kernel = _gate_kernel_bcast
        in_specs = [ms_spec, x_spec]
        operands = (ms, x_rows)

    out_rows = pl.pallas_call(
        kernel,
        out_shape=jax.ShapeDtypeStruct((Rp, L), x_nchw.dtype),
        grid_spec=pltpu.PrefetchScalarGridSpec(
            num_scalar_prefetch=0,
            grid=grid,
            in_specs=in_specs,
            out_specs=out_spec),
        compiler_params=pltpu.CompilerParams(
            dimension_semantics=("parallel", "parallel"),
            vmem_limit_bytes=vmem_limit),
    )(*operands)

    return out_rows.reshape(B, C, H, W)


# -----------------------------------------------------------------------------
# Full forward
# -----------------------------------------------------------------------------

def sequential_hgelu_v4b(x, w1, b1, w21, b21, w22, b22, *, eps=1e-5):
    """Forward pass of SequecialHGELUV4B.

    x : (B, C, H, W) or (B, C).  Weights stored as (in, out); biases (1, out).
    dropout_p = 0 in the reference config => nn.Identity (no-op).
    """
    squeeze_2d = (x.ndim == 2)
    x_nchw = x[:, :, None, None] if squeeze_2d else x
    B, C, H, W = x_nchw.shape

    # ---- Stage 1 (XLA): adaptive avg-pool + tiny fc chain + exp.
    # O(B*C*C/r) work on MXU-hostile shapes; keep it off the kernel hot path.
    # TODO(synk): for feature maps that fit VMEM, fuse this pooling pass into
    # the gate kernel to cut HBM passes over x from 3 to 2.
    pooled = jnp.mean(x_nchw.reshape(B, C, H * W), axis=-1)      # (B, C)
    h = pooled @ w1 + b1                                         # (B, Cr)
    mu = h @ w21 + b21                                           # (B, C)
    log_var = h @ w22 + b22                                      # (B, C)
    std = jnp.exp(0.5 * log_var)                                 # (B, C)
    # Exact reciprocal (keeps 1e-5 accuracy), with the erf 1/sqrt(2) folded in.
    scale = (1.0 / (std + eps)) * _INV_SQRT2                     # (B, C)

    out = _hgelu_gate_4d(x_nchw, mu, scale)
    return out[:, :, 0, 0] if squeeze_2d else out


def _reference(x, w1, b1, w21, b21, w22, b22, eps=1e-5):
    """Pure-JAX reference mirroring the PyTorch forward exactly."""
    pooled = jnp.mean(x, axis=(2, 3))
    h = pooled @ w1 + b1
    mu = h @ w21 + b21
    log_var = h @ w22 + b22
    std = jnp.exp(0.5 * log_var)
    B, C = mu.shape
    norm = (x - mu.reshape(B, C, 1, 1)) / (std.reshape(B, C, 1, 1) + eps)
    p = 0.5 * (1.0 + jax.lax.erf(norm / math.sqrt(2.0)))
    weight = jnp.where(p < 0.5, p, 1.0 - p)
    return weight * x


if __name__ == "__main__":
    def make_params(key, C, r):
        Cr = max(1, C // r)
        k1, k2, k3, k4, k5, k6 = jax.random.split(key, 6)
        lim1 = 1.0 / math.sqrt(C)
        lim2 = 1.0 / math.sqrt(Cr)
        w1 = jax.random.uniform(k1, (C, Cr), jnp.float32, -lim1, lim1)
        b1 = jax.random.uniform(k2, (1, Cr), jnp.float32, -lim1, lim1)
        w21 = jax.random.uniform(k3, (Cr, C), jnp.float32, -lim2, lim2)
        b21 = jax.random.uniform(k4, (1, C), jnp.float32, -lim2, lim2)
        w22 = jax.random.uniform(k5, (Cr, C), jnp.float32, -lim2, lim2)
        b22 = jax.random.uniform(k6, (1, C), jnp.float32, -lim2, lim2)
        return w1, b1, w21, b21, w22, b22

    eps = 1e-5
    root = jax.random.PRNGKey(0)
    fn = jax.jit(functools.partial(sequential_hgelu_v4b, eps=eps))

    # Case 1: S = 64  (< 128)  -> exercises the row-packed lane-dense path (k=2).
    # Case 2: S = 128 (% 128)  -> exercises the plain broadcast path (k=1).
    for (B, C, H, W) in [(2, 64, 8, 8), (2, 32, 16, 8)]:
        kx, kp = jax.random.split(jax.random.fold_in(root, C))
        x = jax.random.normal(kx, (B, C, H, W), dtype=jnp.float32)
        params = make_params(kp, C, 16)

        out = jax.block_until_ready(fn(x, *params))
        ref = _reference(x, *params, eps=eps)

        assert out.shape == (B, C, H, W)
        max_err = float(jnp.max(jnp.abs(out - ref)))
        assert jnp.allclose(out, ref, atol=1e-5, rtol=1e-5), max_err

    print("KERNEL_OK")
</pallas_src>

<mosaic_0001>
module attributes {stable_mosaic.version = 11 : i64} {
  func.func @_gate_kernel_packed(%arg0: i32, %arg1: i32, %arg2: memref<64x4xf32, #tpu.memory_space<vmem>>, %arg3: memref<2x128xf32, #tpu.memory_space<vmem>>, %arg4: memref<64x128xf32, #tpu.memory_space<vmem>>, %arg5: memref<64x128xf32, #tpu.memory_space<vmem>>) attributes {dimension_semantics = [#tpu.dimension_semantics<parallel>, #tpu.dimension_semantics<parallel>], iteration_bounds = array<i64: 1, 1>, scalar_prefetch = 0 : i64, scratch_operands = 0 : i64, tpu.core_type = #tpu.core_type<tc>, window_params = [{transform_indices = @transform_0, window_bounds = array<i64: 64, 4>}, {transform_indices = @transform_1, window_bounds = array<i64: 2, 128>}, {transform_indices = @transform_2, window_bounds = array<i64: 64, 128>}, {transform_indices = @transform_3, window_bounds = array<i64: 64, 128>}]} {
    %c0 = arith.constant 0 : index
    %c0_0 = arith.constant 0 : index
    %0 = vector.load %arg4[%c0, %c0_0] : memref<64x128xf32, #tpu.memory_space<vmem>>, vector<64x128xf32>
    %c0_1 = arith.constant 0 : index
    %c0_2 = arith.constant 0 : index
    %1 = vector.load %arg2[%c0_1, %c0_2] : memref<64x4xf32, #tpu.memory_space<vmem>>, vector<64x4xf32>
    %c0_3 = arith.constant 0 : index
    %c0_4 = arith.constant 0 : index
    %2 = vector.load %arg3[%c0_3, %c0_4] : memref<2x128xf32, #tpu.memory_space<vmem>>, vector<2x128xf32>
    %3 = vector.extract_strided_slice %1 {offsets = [0, 0], sizes = [64, 2], strides = [1, 1]} : vector<64x4xf32> to vector<64x2xf32>
    %cst = arith.constant dense<0.000000e+00> : vector<64x128xf32>
    %4 = tpu.matmul %3, %2, %cst {dimension_numbers = #tpu.dot_dimension_numbers<[1], [0], [0], [1], [0, 0, 1, 1], [], []>} : vector<64x2xf32>, vector<2x128xf32>, vector<64x128xf32> -> vector<64x128xf32>
    %5 = vector.extract_strided_slice %1 {offsets = [0, 2], sizes = [64, 2], strides = [1, 1]} : vector<64x4xf32> to vector<64x2xf32>
    %cst_5 = arith.constant dense<0.000000e+00> : vector<64x128xf32>
    %6 = tpu.matmul %5, %2, %cst_5 {dimension_numbers = #tpu.dot_dimension_numbers<[1], [0], [0], [1], [0, 0, 1, 1], [], []>} : vector<64x2xf32>, vector<2x128xf32>, vector<64x128xf32> -> vector<64x128xf32>
    %7 = arith.subf %0, %4 : vector<64x128xf32>
    %8 = math.absf %7 : vector<64x128xf32>
    %9 = arith.mulf %8, %6 : vector<64x128xf32>
    %10 = math.erf %9 : vector<64x128xf32>
    %cst_6 = arith.constant 5.000000e-01 : f32
    %11 = vector.broadcast %cst_6 : f32 to vector<64x128xf32>
    %12 = arith.mulf %11, %10 : vector<64x128xf32>
    %cst_7 = arith.constant 5.000000e-01 : f32
    %13 = vector.broadcast %cst_7 : f32 to vector<64x128xf32>
    %14 = arith.subf %13, %12 : vector<64x128xf32>
    %15 = arith.mulf %14, %0 : vector<64x128xf32>
    %c0_8 = arith.constant 0 : index
    %c0_9 = arith.constant 0 : index
    %16 = vector.load %arg5[%c0_8, %c0_9] : memref<64x128xf32, #tpu.memory_space<vmem>>, vector<64x128xf32>
    tpu.vector_store %arg5[%c0_8, %c0_9], %15 {strides = array<i32>} : memref<64x128xf32, #tpu.memory_space<vmem>>, vector<64x128xf32>,
    return
  }
  func.func @transform_0(%arg0: i32, %arg1: i32) -> (i32, i32) {
    %c0_i32 = arith.constant 0 : i32
    %c0_i32_0 = arith.constant 0 : i32
    return %arg0, %c0_i32 : i32, i32
  }
  func.func @transform_1(%arg0: i32, %arg1: i32) -> (i32, i32) {
    %c0_i32 = arith.constant 0 : i32
    %c0_i32_0 = arith.constant 0 : i32
    return %c0_i32, %arg1 : i32, i32
  }
  func.func @transform_2(%arg0: i32, %arg1: i32) -> (i32, i32) {
    %c0_i32 = arith.constant 0 : i32
    return %arg0, %arg1 : i32, i32
  }
  func.func @transform_3(%arg0: i32, %arg1: i32) -> (i32, i32) {
    %c0_i32 = arith.constant 0 : i32
    return %arg0, %arg1 : i32, i32
  }
}

</mosaic_0001>

<llo_original>
// kernel: sequential_hgelu_v4b.1
$region0: #{sequential_hgelu_v4b.1}
  #allocation0 [shape = 'u32[]', space=smem, size = 0x4, offset = 0x4, fixed_abs, tag = 'smem constant byte address 0x4 - core index']
  #allocation1 [shape = 'u32[144,128]{1,0:T(1,128)}', space=vmem, size = 0x12000, scoped, tag = 'internal scratch']
  %s0 = inlined_call_operand.vmem [shape: f32[64,4], index: 0, kind: input, shape index: {}]
  %s1 = inlined_call_operand.vmem [shape: f32[2,128], index: 1, kind: input, shape index: {}]
  %s2 = inlined_call_operand.vmem [shape: f32[64,128], index: 2, kind: input, shape index: {}]
  %s3 = inlined_call_operand.vmem [shape: f32[64,128], index: 3, kind: output, shape index: {}]
  %s4 = sld [smem:[#allocation0]]
  $region22: #{sequential_hgelu_v4b.1} parent=0
    _
  %s6 = ssub.s32 1, %s4
  %s7 = scalar_select 0, %s6, %s4
  // Predicated region
  $region2: #{sequential_hgelu_v4b.1} parent=0 // pred_check
    _
  $region3: #{sequential_hgelu_v4b.1} parent=0 // pred_check_branch
    %9 = sbr.rel (0) target = $region5
  $region4: #{sequential_hgelu_v4b.1} parent=0 // pred_region
    _
  $region5: #{sequential_hgelu_v4b.1} parent=0 // pred_fallthru
    _
  // Predicated region
  $region6: #{sequential_hgelu_v4b.1} parent=0 // pred_check
    _
  $region7: #{sequential_hgelu_v4b.1} parent=0 // pred_check_branch
    %11 = sbr.rel (0) target = $region9
  $region8: #{sequential_hgelu_v4b.1} parent=0 // pred_region
    _
  $region9: #{sequential_hgelu_v4b.1} parent=0 // pred_fallthru
    _
  // Predicated region
  $region10: #{sequential_hgelu_v4b.1} parent=0 // pred_check
    _
  $region11: #{sequential_hgelu_v4b.1} parent=0 // pred_check_branch
    %13 = sbr.rel (0) target = $region13
  $region12: #{sequential_hgelu_v4b.1} parent=0 // pred_region
    _
  $region13: #{sequential_hgelu_v4b.1} parent=0 // pred_fallthru
    _
  %v14 = vld [vmem:[%s2] sm:$0xff]
  %v15 = vld [vmem:[%s2 + $0x8] sm:$0xff]
  %v16 = vld [vmem:[%s2 + $0x10] sm:$0xff]
  %v17 = vld [vmem:[%s2 + $0x18] sm:$0xff]
  %v18 = vld [vmem:[%s2 + $0x20] sm:$0xff]
  %v19 = vld [vmem:[%s2 + $0x28] sm:$0xff]
  %v20 = vld [vmem:[%s2 + $0x30] sm:$0xff]
  %v21 = vld [vmem:[%s2 + $0x38] sm:$0xff]
  %v22 = vld [vmem:[%s0] sm:$0xff]
  %v23 = vld [vmem:[%s0 + $0x8] sm:$0xff]
  %v24 = vld [vmem:[%s0 + $0x10] sm:$0xff]
  %v25 = vld [vmem:[%s0 + $0x18] sm:$0xff]
  %v26 = vld [vmem:[%s0 + $0x20] sm:$0xff]
  %v27 = vld [vmem:[%s0 + $0x28] sm:$0xff]
  %v28 = vld [vmem:[%s0 + $0x30] sm:$0xff]
  %v29 = vld [vmem:[%s0 + $0x38] sm:$0xff]
  %v30 = vld [vmem:[%s1] sm:$0x3]
  %vm31 = vcmask 15360
  %v33 = vsel %vm31, %v22, 0
  %v36 = vsel %vm31, %v23, 0
  %v39 = vsel %vm31, %v24, 0
  %v42 = vsel %vm31, %v25, 0
  %v45 = vsel %vm31, %v26, 0
  %v48 = vsel %vm31, %v27, 0
  %v51 = vsel %vm31, %v28, 0
  %v54 = vsel %vm31, %v29, 0
  %vm56 = vcmask 1041408
  %v58 = vsel %vm56, %v30, 0
  %60 = vmatprep.subr.mxu0 0.0
  %61 = vmatpush1.msra.mxu0 %v58
  %62 = vmatprep.subr.mxu0 0.0
  %63 = vmatpush1.msra.mxu0 0.0
  %64 = vmatprep.subr.mxu0 0.0
  %65 = vmatpush1.msra.mxu0 0.0
  %66 = vmatprep.subr.mxu0 0.0
  %67 = vmatpush1.msra.mxu0 0.0
  %68 = vmatprep.subr.mxu0 0.0
  %69 = vmatpush1.msra.mxu0 0.0
  %70 = vmatprep.subr.mxu0 0.0
  %71 = vmatpush1.msra.mxu0 0.0
  %72 = vmatprep.subr.mxu0 0.0
  %73 = vmatpush1.msra.mxu0 0.0
  %74 = vmatprep.subr.mxu0 0.0
  %75 = vmatpush1.msra.mxu0 0.0
  %76 = vmatprep.subr.mxu0 0.0
  %77 = vmatpush1.msra.mxu0 0.0
  %78 = vmatprep.subr.mxu0 0.0
  %79 = vmatpush1.msra.mxu0 0.0
  %80 = vmatprep.subr.mxu0 0.0
  %81 = vmatpush1.msra.mxu0 0.0
  %82 = vmatprep.subr.mxu0 0.0
  %83 = vmatpush1.msra.mxu0 0.0
  %84 = vmatprep.subr.mxu0 0.0
  %85 = vmatpush1.msra.mxu0 0.0
  %86 = vmatprep.subr.mxu0 0.0
  %87 = vmatpush1.msra.mxu0 0.0
  %88 = vmatprep.subr.mxu0 0.0
  %89 = vmatpush1.msra.mxu0 0.0
  %90 = vmatprep.subr.mxu0 0.0
  %91 = vmatpush1.msra.mxu0 0.0
  %92 = vmatprep.subr.mxu0 0.0
  %93 = vmatpush1.msra.mxu0 0.0
  %94 = vmatprep.subr.mxu0 0.0
  %95 = vmatpush1.msra.mxu0 0.0
  %96 = vmatprep.subr.mxu0 0.0
  %97 = vmatpush1.msra.mxu0 0.0
  %98 = vmatprep.subr.mxu0 0.0
  %99 = vmatpush1.msra.mxu0 0.0
  %100 = vmatprep.subr.mxu0 0.0
  %101 = vmatpush1.msra.mxu0 0.0
  %102 = vmatprep.subr.mxu0 0.0
  %103 = vmatpush1.msra.mxu0 0.0
  %104 = vmatprep.subr.mxu0 0.0
  %105 = vmatpush1.msra.mxu0 0.0
  %106 = vmatprep.subr.mxu0 0.0
  %107 = vmatpush1.msra.mxu0 0.0
  %108 = vmatprep.subr.mxu0 0.0
  %109 = vmatpush1.msra.mxu0 0.0
  %110 = vmatprep.subr.mxu0 0.0
  %111 = vmatpush1.msra.mxu0 0.0
  %112 = vmatprep.subr.mxu0 0.0
  %113 = vmatpush1.msra.mxu0 0.0
  %114 = vmatprep.subr.mxu0 0.0
  %115 = vmatpush1.msra.mxu0 0.0
  %116 = vmatprep.subr.mxu0 0.0
  %117 = vmatpush1.msra.mxu0 0.0
  %118 = vmatprep.subr.mxu0 0.0
  %119 = vmatpush1.msra.mxu0 0.0
  %120 = vmatprep.subr.mxu0 0.0
  %121 = vmatpush1.msra.mxu0 0.0
  %122 = vmatprep.subr.mxu0 0.0
  %123 = vmatpush1.msra.mxu0 0.0
  %124 = vmatprep.mubr.f32.mxu0 0.0
  %125 = vmatmul.mubr.f32.gmra.mrb[0].mxu0 %v33
  %v126 = vpop.f32.mrb[0].mxu0
  %v127 = vadd.f32 0.0, %v126
  %v128 = vpop.f32.mrb[0].mxu0
  %129 = vmatprep.mubr.f32.mxu0 0.0
  %130 = vmatmul.mubr.f32.gmra.mrb[0].mxu0 %v36
  %v131 = vpop.f32.mrb[0].mxu0
  %v132 = vadd.f32 0.0, %v131
  %v133 = vpop.f32.mrb[0].mxu0
  %134 = vmatprep.mubr.f32.mxu0 0.0
  %135 = vmatmul.mubr.f32.gmra.mrb[0].mxu0 %v39
  %v136 = vpop.f32.mrb[0].mxu0
  %v137 = vadd.f32 0.0, %v136
  %v138 = vpop.f32.mrb[0].mxu0
  %139 = vmatprep.mubr.f32.mxu0 0.0
  %140 = vmatmul.mubr.f32.gmra.mrb[0].mxu0 %v42
  %v141 = vpop.f32.mrb[0].mxu0
  %v142 = vadd.f32 0.0, %v141
  %v143 = vpop.f32.mrb[0].mxu0
  %144 = vmatprep.mubr.f32.mxu0 0.0
  %145 = vmatmul.mubr.f32.gmra.mrb[0].mxu0 %v45
  %v146 = vpop.f32.mrb[0].mxu0
  %v147 = vadd.f32 0.0, %v146
  %v148 = vpop.f32.mrb[0].mxu0
  %149 = vmatprep.mubr.f32.mxu0 0.0
  %150 = vmatmul.mubr.f32.gmra.mrb[0].mxu0 %v48
  %v151 = vpop.f32.mrb[0].mxu0
  %v152 = vadd.f32 0.0, %v151
  %v153 = vpop.f32.mrb[0].mxu0
  %154 = vmatprep.mubr.f32.mxu0 0.0
  %155 = vmatmul.mubr.f32.gmra.mrb[0].mxu0 %v51
  %v156 = vpop.f32.mrb[0].mxu0
  %v157 = vadd.f32 0.0, %v156
  %v158 = vpop.f32.mrb[0].mxu0
  %159 = vmatprep.mubr.f32.mxu0 0.0
  %160 = vmatmul.mubr.f32.gmra.mrb[0].mxu0 %v54
  %v161 = vpop.f32.mrb[0].mxu0
  %v162 = vadd.f32 0.0, %v161
  %v163 = vpop.f32.mrb[0].mxu0
  %164 = vdwg.mxu0
  %165 = vrot.lane.b32.xlu0 %v22, 126
  %v166 = vpop.permute.xlu0 %165
  %167 = vrot.lane.b32.xlu0 %v23, 126
  %v168 = vpop.permute.xlu0 %167
  %169 = vrot.lane.b32.xlu0 %v24, 126
  %v170 = vpop.permute.xlu0 %169
  %171 = vrot.lane.b32.xlu0 %v25, 126
  %v172 = vpop.permute.xlu0 %171
  %173 = vrot.lane.b32.xlu0 %v26, 126
  %v174 = vpop.permute.xlu0 %173
  %175 = vrot.lane.b32.xlu0 %v27, 126
  %v176 = vpop.permute.xlu0 %175
  %177 = vrot.lane.b32.xlu0 %v28, 126
  %v178 = vpop.permute.xlu0 %177
  %179 = vrot.lane.b32.xlu0 %v29, 126
  %v180 = vpop.permute.xlu0 %179
  %v181 = vsel %vm31, %v166, 0
  %v183 = vsel %vm31, %v168, 0
  %v185 = vsel %vm31, %v170, 0
  %v187 = vsel %vm31, %v172, 0
  %v189 = vsel %vm31, %v174, 0
  %v191 = vsel %vm31, %v176, 0
  %v193 = vsel %vm31, %v178, 0
  %v195 = vsel %vm31, %v180, 0
  %197 = vmatprep.subr.mxu0 0.0
  %198 = vmatpush1.msra.mxu0 %v58
  %199 = vmatprep.subr.mxu0 0.0
  %200 = vmatpush1.msra.mxu0 0.0
  %201 = vmatprep.subr.mxu0 0.0
  %202 = vmatpush1.msra.mxu0 0.0
  %203 = vmatprep.subr.mxu0 0.0
  %204 = vmatpush1.msra.mxu0 0.0
  %205 = vmatprep.subr.mxu0 0.0
  %206 = vmatpush1.msra.mxu0 0.0
  %207 = vmatprep.subr.mxu0 0.0
  %208 = vmatpush1.msra.mxu0 0.0
  %209 = vmatprep.subr.mxu0 0.0
  %210 = vmatpush1.msra.mxu0 0.0
  %211 = vmatprep.subr.mxu0 0.0
  %212 = vmatpush1.msra.mxu0 0.0
  %213 = vmatprep.subr.mxu0 0.0
  %214 = vmatpush1.msra.mxu0 0.0
  %215 = vmatprep.subr.mxu0 0.0
  %216 = vmatpush1.msra.mxu0 0.0
  %217 = vmatprep.subr.mxu0 0.0
  %218 = vmatpush1.msra.mxu0 0.0
  %219 = vmatprep.subr.mxu0 0.0
  %220 = vmatpush1.msra.mxu0 0.0
  %221 = vmatprep.subr.mxu0 0.0
  %222 = vmatpush1.msra.mxu0 0.0
  %223 = vmatprep.subr.mxu0 0.0
  %224 = vmatpush1.msra.mxu0 0.0
  %225 = vmatprep.subr.mxu0 0.0
  %226 = vmatpush1.msra.mxu0 0.0
  %227 = vmatprep.subr.mxu0 0.0
  %228 = vmatpush1.msra.mxu0 0.0
  %229 = vmatprep.subr.mxu0 0.0
  %230 = vmatpush1.msra.mxu0 0.0
  %231 = vmatprep.subr.mxu0 0.0
  %232 = vmatpush1.msra.mxu0 0.0
  %233 = vmatprep.subr.mxu0 0.0
  %234 = vmatpush1.msra.mxu0 0.0
  %235 = vmatprep.subr.mxu0 0.0
  %236 = vmatpush1.msra.mxu0 0.0
  %237 = vmatprep.subr.mxu0 0.0
  %238 = vmatpush1.msra.mxu0 0.0
  %239 = vmatprep.subr.mxu0 0.0
  %240 = vmatpush1.msra.mxu0 0.0
  %241 = vmatprep.subr.mxu0 0.0
  %242 = vmatpush1.msra.mxu0 0.0
  %243 = vmatprep.subr.mxu0 0.0
  %244 = vmatpush1.msra.mxu0 0.0
  %245 = vmatprep.subr.mxu0 0.0
  %246 = vmatpush1.msra.mxu0 0.0
  %247 = vmatprep.subr.mxu0 0.0
  %248 = vmatpush1.msra.mxu0 0.0
  %249 = vmatprep.subr.mxu0 0.0
  %250 = vmatpush1.msra.mxu0 0.0
  %251 = vmatprep.subr.mxu0 0.0
  %252 = vmatpush1.msra.mxu0 0.0
  %253 = vmatprep.subr.mxu0 0.0
  %254 = vmatpush1.msra.mxu0 0.0
  %255 = vmatprep.subr.mxu0 0.0
  %256 = vmatpush1.msra.mxu0 0.0
  %257 = vmatprep.subr.mxu0 0.0
  %258 = vmatpush1.msra.mxu0 0.0
  %259 = vmatprep.subr.mxu0 0.0
  %260 = vmatpush1.msra.mxu0 0.0
  %261 = vmatprep.mubr.f32.mxu0 0.0
  %262 = vmatmul.mubr.f32.gmra.mrb[0].mxu0 %v181
  %v263 = vpop.f32.mrb[0].mxu0
  %v264 = vadd.f32 0.0, %v263
  %v265 = vpop.f32.mrb[0].mxu0
  %266 = vmatprep.mubr.f32.mxu0 0.0
  %267 = vmatmul.mubr.f32.gmra.mrb[0].mxu0 %v183
  %v268 = vpop.f32.mrb[0].mxu0
  %v269 = vadd.f32 0.0, %v268
  %v270 = vpop.f32.mrb[0].mxu0
  %271 = vmatprep.mubr.f32.mxu0 0.0
  %272 = vmatmul.mubr.f32.gmra.mrb[0].mxu0 %v185
  %v273 = vpop.f32.mrb[0].mxu0
  %v274 = vadd.f32 0.0, %v273
  %v275 = vpop.f32.mrb[0].mxu0
  %276 = vmatprep.mubr.f32.mxu0 0.0
  %277 = vmatmul.mubr.f32.gmra.mrb[0].mxu0 %v187
  %v278 = vpop.f32.mrb[0].mxu0
  %v279 = vadd.f32 0.0, %v278
  %v280 = vpop.f32.mrb[0].mxu0
  %281 = vmatprep.mubr.f32.mxu0 0.0
  %282 = vmatmul.mubr.f32.gmra.mrb[0].mxu0 %v189
  %v283 = vpop.f32.mrb[0].mxu0
  %v284 = vadd.f32 0.0, %v283
  %v285 = vpop.f32.mrb[0].mxu0
  %286 = vmatprep.mubr.f32.mxu0 0.0
  %287 = vmatmul.mubr.f32.gmra.mrb[0].mxu0 %v191
  %v288 = vpop.f32.mrb[0].mxu0
  %v289 = vadd.f32 0.0, %v288
  %v290 = vpop.f32.mrb[0].mxu0
  %291 = vmatprep.mubr.f32.mxu0 0.0
  %292 = vmatmul.mubr.f32.gmra.mrb[0].mxu0 %v193
  %v293 = vpop.f32.mrb[0].mxu0
  %v294 = vadd.f32 0.0, %v293
  %v295 = vpop.f32.mrb[0].mxu0
  %296 = vmatprep.mubr.f32.mxu0 0.0
  %297 = vmatmul.mubr.f32.gmra.mrb[0].mxu0 %v195
  %v298 = vpop.f32.mrb[0].mxu0
  %v299 = vadd.f32 0.0, %v298
  %v300 = vpop.f32.mrb[0].mxu0
  %301 = vdwg.mxu0
  %v302 = vsub.f32 %v14, %v127
  %v303 = vsub.f32 %v15, %v132
  %v304 = vsub.f32 %v16, %v137
  %v305 = vsub.f32 %v17, %v142
  %v306 = vsub.f32 %v18, %v147
  %v307 = vsub.f32 %v19, %v152
  %v308 = vsub.f32 %v20, %v157
  %v309 = vsub.f32 %v21, %v162
  %v310 = vand.u32 2147483647, %v302
  %v311 = vand.u32 2147483647, %v303
  %v312 = vand.u32 2147483647, %v304
  %v313 = vand.u32 2147483647, %v305
  %v314 = vand.u32 2147483647, %v306
  %v315 = vand.u32 2147483647, %v307
  %v316 = vand.u32 2147483647, %v308
  %v317 = vand.u32 2147483647, %v309
  %v318 = vmul.f32 %v310, %v264
  %v319 = vmul.f32 %v311, %v269
  %v320 = vmul.f32 %v312, %v274
  %v321 = vmul.f32 %v313, %v279
  %v322 = vmul.f32 %v314, %v284
  %v323 = vmul.f32 %v315, %v289
  %v324 = vmul.f32 %v316, %v294
  %v325 = vmul.f32 %v317, %v299
  %v326 = verf.f32.pop %v318
  %v327 = verf.f32.pop %v319
  %v328 = verf.f32.pop %v320
  %v329 = verf.f32.pop %v321
  %v330 = verf.f32.pop %v322
  %v331 = verf.f32.pop %v323
  %v332 = verf.f32.pop %v324
  %v333 = verf.f32.pop %v325
  %v334 = vmul.f32 %v326, 0.5
  %v335 = vmul.f32 %v327, 0.5
  %v336 = vmul.f32 %v328, 0.5
  %v337 = vmul.f32 %v329, 0.5
  %v338 = vmul.f32 %v330, 0.5
  %v339 = vmul.f32 %v331, 0.5
  %v340 = vmul.f32 %v332, 0.5
  %v341 = vmul.f32 %v333, 0.5
  %v342 = vsub.f32 0.5, %v334
  %v343 = vsub.f32 0.5, %v335
  %v344 = vsub.f32 0.5, %v336
  %v345 = vsub.f32 0.5, %v337
  %v346 = vsub.f32 0.5, %v338
  %v347 = vsub.f32 0.5, %v339
  %v348 = vsub.f32 0.5, %v340
  %v349 = vsub.f32 0.5, %v341
  %v350 = vmul.f32 %v342, %v14
  %v351 = vmul.f32 %v343, %v15
  %v352 = vmul.f32 %v344, %v16
  %v353 = vmul.f32 %v345, %v17
  %v354 = vmul.f32 %v346, %v18
  %v355 = vmul.f32 %v347, %v19
  %v356 = vmul.f32 %v348, %v20
  %v357 = vmul.f32 %v349, %v21
  %358 = vst [vmem:[%s3] sm:$0xff] %v350
  %359 = vst [vmem:[%s3 + $0x8] sm:$0xff] %v351
  %360 = vst [vmem:[%s3 + $0x10] sm:$0xff] %v352
  %361 = vst [vmem:[%s3 + $0x18] sm:$0xff] %v353
  %362 = vst [vmem:[%s3 + $0x20] sm:$0xff] %v354
  %363 = vst [vmem:[%s3 + $0x28] sm:$0xff] %v355
  %364 = vst [vmem:[%s3 + $0x30] sm:$0xff] %v356
  %365 = vst [vmem:[%s3 + $0x38] sm:$0xff] %v357
  // Predicated region
  $region14: #{sequential_hgelu_v4b.1} parent=0 // pred_check
    _
  $region15: #{sequential_hgelu_v4b.1} parent=0 // pred_check_branch
    %367 = sbr.rel (0) target = $region17
  $region16: #{sequential_hgelu_v4b.1} parent=0 // pred_region
    _
  $region17: #{sequential_hgelu_v4b.1} parent=0 // pred_fallthru
    _
  // Predicated region
  $region18: #{sequential_hgelu_v4b.1} parent=0 // pred_check
    _
  $region19: #{sequential_hgelu_v4b.1} parent=0 // pred_check_branch
    %369 = sbr.rel (0) target = $region21
  $region20: #{sequential_hgelu_v4b.1} parent=0 // pred_region
    _
  $region21: #{sequential_hgelu_v4b.1} parent=0 // pred_fallthru
    _

</llo_original>
